<compile_context>
chip_gen: v5e
topology: v5e:2x2
jax: 0.10.0
libtpu: 0.0.40
codegen_flags: <defaults>
</compile_context>

<pallas_src>
import functools

import jax
import jax.numpy as jnp
from jax.experimental import pallas as pl
from jax.experimental.pallas import tpu as pltpu


def _smape_kernel(forecast_ref, target_ref, mask_ref, out_ref, acc_ref,
                  *, scale, valid_rows, tile_rows, ragged):
    i = pl.program_id(0)

    @pl.when(i == 0)
    def _init():
        acc_ref[...] = jnp.zeros_like(acc_ref)

    f = forecast_ref[...].astype(jnp.float32)
    y = target_ref[...].astype(jnp.float32)
    m = mask_ref[...].astype(jnp.float32)

    num = jnp.abs(f - y)
    den = jnp.abs(f) + jnp.abs(y)
    # divide_no_nan: den >= num >= 0, so +Inf is unreachable; only 0/0 -> 0.
    ratio = jnp.where(den > 0.0, num / den, 0.0)
    val = ratio * m

    if ragged:
        # Last tile may read past the end of the batch axis (unspecified data);
        # zero out those rows.  select() does not propagate NaNs.
        row = i * tile_rows + jax.lax.broadcasted_iota(jnp.int32, val.shape, 0)
        val = jnp.where(row < valid_rows, val, 0.0)

    # Pure-VPU accumulation; defer the cross-lane reduce to the final step.
    acc_ref[...] += val

    @pl.when(i == pl.num_programs(0) - 1)
    def _finalize():
        out_ref[0, 0] = jnp.float32(scale) * jnp.sum(acc_ref[...])


def smape_loss(insample, freq, forecast, target, mask):
    """JAX/Pallas equivalent of smape_loss.forward.

    insample / freq mirror the PyTorch signature but are unused (exactly as in
    the reference module).  Returns a float32 scalar.
    """
    del insample, freq  # unused in the reference forward as well
    B, T = forecast.shape
    scale = 200.0 / float(B * T)

    # Per-input tile target ~2 MiB of f32: 3 inputs x 2 pipeline buffers + the
    # f32 accumulator tile stays < ~16 MiB, under every generation's scoped
    # VMEM (we also raise the limit explicitly below).
    TILE_BYTES = 2 * 1024 * 1024
    if B <= 8:
        tb = B  # block equals full batch dim (allowed regardless of 8-divisibility)
    else:
        rows_budget = max(8, (TILE_BYTES // (max(T, 1) * 4)) // 8 * 8)
        tb = int(min(rows_budget, (B // 8) * 8))  # multiple of 8, <= B
    grid = (pl.cdiv(B, tb),)
    ragged = (B % tb) != 0

    kernel = functools.partial(
        _smape_kernel, scale=scale, valid_rows=B, tile_rows=tb, ragged=ragged)

    out = pl.pallas_call(
        kernel,
        out_shape=jax.ShapeDtypeStruct((1, 1), jnp.float32),
        grid=grid,
        in_specs=[
            pl.BlockSpec((tb, T), lambda i: (i, 0)),
            pl.BlockSpec((tb, T), lambda i: (i, 0)),
            pl.BlockSpec((tb, T), lambda i: (i, 0)),
        ],
        out_specs=pl.BlockSpec(memory_space=pltpu.SMEM),
        scratch_shapes=[pltpu.VMEM((tb, T), jnp.float32)],
        compiler_params=pltpu.CompilerParams(
            dimension_semantics=("arbitrary",),   # reduction axis w/ accumulator
            vmem_limit_bytes=32 * 1024 * 1024,
        ),
    )(forecast, target, mask)
    return out[0, 0]


if __name__ == "__main__":
    key = jax.random.PRNGKey(0)

    def ref_smape(forecast, target, mask):
        num = jnp.abs(forecast - target)
        den = jnp.abs(forecast) + jnp.abs(target)
        r = num / den
        r = jnp.where(jnp.isnan(r) | jnp.isinf(r), 0.0, r)
        return 200.0 * jnp.mean(r * mask)

    # Two cases: a tiny single-tile one, and a ragged multi-tile one that
    # exercises the grid accumulation + in-kernel row masking path.
    for (batch, time) in [(8, 128), (20, 128)]:
        k1, k2, k3 = jax.random.split(jax.random.fold_in(key, batch), 3)
        forecast = jax.random.normal(k1, (batch, time), dtype=jnp.float32)
        target = jax.random.normal(k2, (batch, time), dtype=jnp.float32)
        mask = (jax.random.uniform(k3, (batch, time)) > 0.2).astype(jnp.float32)
        # Force a few exact 0/0 cases to exercise divide_no_nan.
        forecast = forecast.at[:, :4].set(0.0)
        target = target.at[:, :4].set(0.0)

        insample = jnp.zeros((batch, 2 * time), dtype=jnp.float32)  # unused
        freq = 1  # unused

        loss = smape_loss(insample, freq, forecast, target, mask)
        jax.block_until_ready(loss)

        ref = ref_smape(forecast, target, mask)
        assert jnp.allclose(loss, ref, rtol=1e-5, atol=1e-5), (batch, time, loss, ref)

    print("KERNEL_OK")
</pallas_src>

<mosaic_0001>
module attributes {stable_mosaic.version = 11 : i64} {
  func.func @_smape_kernel(%arg0: i32, %arg1: memref<8x128xf32, #tpu.memory_space<vmem>>, %arg2: memref<8x128xf32, #tpu.memory_space<vmem>>, %arg3: memref<8x128xf32, #tpu.memory_space<vmem>>, %arg4: memref<1x1xf32, #tpu.memory_space<smem>>, %arg5: memref<8x128xf32, #tpu.memory_space<vmem>>) attributes {dimension_semantics = [#tpu.dimension_semantics<arbitrary>], iteration_bounds = array<i64: 1>, scalar_prefetch = 0 : i64, scratch_operands = 1 : i64, tpu.core_type = #tpu.core_type<tc>, window_params = [{transform_indices = @transform_0, window_bounds = array<i64: 8, 128>}, {transform_indices = @transform_1, window_bounds = array<i64: 8, 128>}, {transform_indices = @transform_2, window_bounds = array<i64: 8, 128>}, {transform_indices = @transform_3, window_bounds = array<i64: 1, 1>}]} {
    %c0_i32 = arith.constant 0 : i32
    %0 = arith.cmpi eq, %arg0, %c0_i32 : i32
    %1 = arith.extui %0 : i1 to i32
    %c0_i32_0 = arith.constant 0 : i32
    %2 = arith.cmpi ne, %1, %c0_i32_0 : i32
    scf.if %2 {
      %cst_13 = arith.constant 0.000000e+00 : f32
      %23 = vector.broadcast %cst_13 : f32 to vector<8x128xf32>
      %c0_14 = arith.constant 0 : index
      %c0_15 = arith.constant 0 : index
      %24 = vector.load %arg5[%c0_14, %c0_15] : memref<8x128xf32, #tpu.memory_space<vmem>>, vector<8x128xf32>
      tpu.vector_store %arg5[%c0_14, %c0_15], %23 {strides = array<i32>} : memref<8x128xf32, #tpu.memory_space<vmem>>, vector<8x128xf32>,
    } else {
    }
    %c0 = arith.constant 0 : index
    %c0_1 = arith.constant 0 : index
    %3 = vector.load %arg1[%c0, %c0_1] : memref<8x128xf32, #tpu.memory_space<vmem>>, vector<8x128xf32>
    %c0_2 = arith.constant 0 : index
    %c0_3 = arith.constant 0 : index
    %4 = vector.load %arg2[%c0_2, %c0_3] : memref<8x128xf32, #tpu.memory_space<vmem>>, vector<8x128xf32>
    %c0_4 = arith.constant 0 : index
    %c0_5 = arith.constant 0 : index
    %5 = vector.load %arg3[%c0_4, %c0_5] : memref<8x128xf32, #tpu.memory_space<vmem>>, vector<8x128xf32>
    %6 = arith.subf %3, %4 : vector<8x128xf32>
    %7 = math.absf %6 : vector<8x128xf32>
    %8 = math.absf %3 : vector<8x128xf32>
    %9 = math.absf %4 : vector<8x128xf32>
    %10 = arith.addf %8, %9 : vector<8x128xf32>
    %cst = arith.constant 0.000000e+00 : f32
    %11 = vector.broadcast %cst : f32 to vector<8x128xf32>
    %12 = arith.cmpf ogt, %10, %11 : vector<8x128xf32>
    %13 = arith.divf %7, %10 : vector<8x128xf32>
    %cst_6 = arith.constant 0.000000e+00 : f32
    %14 = vector.broadcast %cst_6 : f32 to vector<8x128xf32>
    %15 = arith.select %12, %13, %14 : vector<8x128xi1>, vector<8x128xf32>
    %16 = arith.mulf %15, %5 : vector<8x128xf32>
    %c0_7 = arith.constant 0 : index
    %c0_8 = arith.constant 0 : index
    %17 = vector.load %arg5[%c0_7, %c0_8] : memref<8x128xf32, #tpu.memory_space<vmem>>, vector<8x128xf32>
    %18 = arith.addf %17, %16 : vector<8x128xf32>
    %c0_9 = arith.constant 0 : index
    %c0_10 = arith.constant 0 : index
    %19 = vector.load %arg5[%c0_9, %c0_10] : memref<8x128xf32, #tpu.memory_space<vmem>>, vector<8x128xf32>
    tpu.vector_store %arg5[%c0_9, %c0_10], %18 {strides = array<i32>} : memref<8x128xf32, #tpu.memory_space<vmem>>, vector<8x128xf32>,
    %c0_i32_11 = arith.constant 0 : i32
    %20 = arith.cmpi eq, %arg0, %c0_i32_11 : i32
    %21 = arith.extui %20 : i1 to i32
    %c0_i32_12 = arith.constant 0 : i32
    %22 = arith.cmpi ne, %21, %c0_i32_12 : i32
    scf.if %22 {
      %c0_13 = arith.constant 0 : index
      %c0_14 = arith.constant 0 : index
      %23 = vector.load %arg5[%c0_13, %c0_14] : memref<8x128xf32, #tpu.memory_space<vmem>>, vector<8x128xf32>
      %24 = vector.shape_cast %23 : vector<8x128xf32> to vector<1x8x128xf32>
      %cst_15 = arith.constant dense<0.000000e+00> : vector<1xf32>
      %25 = vector.multi_reduction <add>, %24, %cst_15 [1, 2] : vector<1x8x128xf32> to vector<1xf32>
      %26 = vector.shape_cast %25 : vector<1xf32> to vector<1x1x1xf32>
      %27 = vector.extract %26[0, 0, 0] : f32 from vector<1x1x1xf32>
      %cst_16 = arith.constant 0.1953125 : f32
      %28 = arith.mulf %cst_16, %27 : f32
      %c0_17 = arith.constant 0 : index
      %c0_18 = arith.constant 0 : index
      %29 = memref.load %arg4[%c0_17, %c0_18] : memref<1x1xf32, #tpu.memory_space<smem>>
      memref.store %28, %arg4[%c0_17, %c0_18] : memref<1x1xf32, #tpu.memory_space<smem>>
    } else {
    }
    return
  }
  func.func @transform_0(%arg0: i32) -> (i32, i32) {
    %c0_i32 = arith.constant 0 : i32
    %c0_i32_0 = arith.constant 0 : i32
    return %arg0, %c0_i32 : i32, i32
  }
  func.func @transform_1(%arg0: i32) -> (i32, i32) {
    %c0_i32 = arith.constant 0 : i32
    %c0_i32_0 = arith.constant 0 : i32
    return %arg0, %c0_i32 : i32, i32
  }
  func.func @transform_2(%arg0: i32) -> (i32, i32) {
    %c0_i32 = arith.constant 0 : i32
    %c0_i32_0 = arith.constant 0 : i32
    return %arg0, %c0_i32 : i32, i32
  }
  func.func @transform_3(%arg0: i32) -> (i32, i32) {
    %c0_i32 = arith.constant 0 : i32
    %c0_i32_0 = arith.constant 0 : i32
    %c0_i32_1 = arith.constant 0 : i32
    return %c0_i32, %c0_i32_0 : i32, i32
  }
}

</mosaic_0001>

<llo_original>
// kernel: tpu_custom_call.1
$region0: #{tpu_custom_call.1}
  #allocation0 [shape = 'u32[]', space=smem, size = 0x4, offset = 0x4, fixed_abs, tag = 'smem constant byte address 0x4 - core index']
  #allocation1 [shape = 'u32[72,128]{1,0:T(1,128)}', space=vmem, size = 0x9000, scoped, tag = 'internal scratch']
  #allocation2 [shape = 'f32[8,128]{1,0:T(8,128)}', space=vmem, size = 0x1000, scoped, tag = 'scratch operand']
  %s0 = inlined_call_operand.hbm [shape: f32[8,128], index: 0, kind: input, shape index: {}]
  %s1 = inlined_call_operand.hbm [shape: f32[8,128], index: 1, kind: input, shape index: {}]
  %s2 = inlined_call_operand.hbm [shape: f32[8,128], index: 2, kind: input, shape index: {}]
  %s3 = inlined_call_operand.hbm [shape: f32[1,1], index: 3, kind: output, shape index: {}]
  %s4 = sld [smem:[#allocation0]]
  $region42: #{tpu_custom_call.1} parent=0
    _
  %s6 = ssub.s32 1, %s4
  %s7 = scalar_select 0, %s6, %s4
  $region1: #{tpu_custom_call.1} parent=0
    #allocation3 [shape = 'u8[4096]{0}', space=vmem, size = 0x1000, scoped, tag = 'input window, operand 0, single buffered']
    #allocation4 [shape = 's32[1]{0}', space=sflag, size = 0x4, scoped, tag = 'scoped memory for tpu_custom_call.1']
    #allocation5 [shape = 's32[1]{0}', space=sflag, size = 0x4, scoped, tag = 'scoped memory for tpu_custom_call.1']
    #allocation6 [shape = 'u8[4096]{0}', space=vmem, size = 0x1000, scoped, tag = 'input window, operand 1, single buffered']
    #allocation7 [shape = 's32[1]{0}', space=sflag, size = 0x4, scoped, tag = 'scoped memory for tpu_custom_call.1']
    #allocation8 [shape = 'u8[4096]{0}', space=vmem, size = 0x1000, scoped, tag = 'input window, operand 2, single buffered']
    #allocation9 [shape = 'u8[512]{0}', space=smem, size = 0x200, scoped, tag = 'output window, operand 0, single buffered']
    %8 = vsyncpa [#allocation4], 0
    %9 = vsyncpa [#allocation7], 0
    %10 = vsyncpa [#allocation5], 0
    // Predicated region
    $region2: #{tpu_custom_call.1} parent=1 // pred_check
      _
    $region3: #{tpu_custom_call.1} parent=1 // pred_check_branch
      %12 = sbr.rel (0) target = $region5
    $region4: #{tpu_custom_call.1} parent=1 // pred_region
      %14 = vsyncadd [#allocation4], 0
      %s16 = sshll.u32 %s0, 4
      %s17 = int_to_ptr.hbm [resolvable:$true] %s16
      %s18 = sshll.u32 [#allocation3], 4
      %s19 = int_to_ptr.vmem [resolvable:$true] %s18
      %21 = dma.hbm_to_vmem [thread:$0]  %s17, 128, %s19, [#allocation4]
    $region5: #{tpu_custom_call.1} parent=1 // pred_fallthru
      _
    // Predicated region
    $region6: #{tpu_custom_call.1} parent=1 // pred_check
      _
    $region7: #{tpu_custom_call.1} parent=1 // pred_check_branch
      %23 = sbr.rel (0) target = $region9
    $region8: #{tpu_custom_call.1} parent=1 // pred_region
      %25 = vsyncadd [#allocation7], 0
      %s27 = sshll.u32 %s1, 4
      %s28 = int_to_ptr.hbm [resolvable:$true] %s27
      %s29 = sshll.u32 [#allocation6], 4
      %s30 = int_to_ptr.vmem [resolvable:$true] %s29
      %32 = dma.hbm_to_vmem [thread:$0]  %s28, 128, %s30, [#allocation7]
    $region9: #{tpu_custom_call.1} parent=1 // pred_fallthru
      _
    // Predicated region
    $region10: #{tpu_custom_call.1} parent=1 // pred_check
      _
    $region11: #{tpu_custom_call.1} parent=1 // pred_check_branch
      %34 = sbr.rel (0) target = $region13
    $region12: #{tpu_custom_call.1} parent=1 // pred_region
      %36 = vsyncadd [#allocation7], 0
      %s38 = sshll.u32 %s2, 4
      %s39 = int_to_ptr.hbm [resolvable:$true] %s38
      %s40 = sshll.u32 [#allocation8], 4
      %s41 = int_to_ptr.vmem [resolvable:$true] %s40
      %43 = dma.hbm_to_vmem [thread:$0]  %s39, 128, %s41, [#allocation7]
    $region13: #{tpu_custom_call.1} parent=1 // pred_fallthru
      _
    // Predicated region
    $region14: #{tpu_custom_call.1} parent=1 // pred_check
      _
    $region15: #{tpu_custom_call.1} parent=1 // pred_check_branch
      %45 = sbr.rel (0) target = $region17
    $region16: #{tpu_custom_call.1} parent=1 // pred_region
      %47 = dma.done [#allocation4], 128
    $region17: #{tpu_custom_call.1} parent=1 // pred_fallthru
      _
    // Predicated region
    $region18: #{tpu_custom_call.1} parent=1 // pred_check
      _
    $region19: #{tpu_custom_call.1} parent=1 // pred_check_branch
      %49 = sbr.rel (0) target = $region21
    $region20: #{tpu_custom_call.1} parent=1 // pred_region
      %51 = dma.done [#allocation7], 128
    $region21: #{tpu_custom_call.1} parent=1 // pred_fallthru
      _
    // Predicated region
    $region22: #{tpu_custom_call.1} parent=1 // pred_check
      _
    $region23: #{tpu_custom_call.1} parent=1 // pred_check_branch
      %53 = sbr.rel (0) target = $region25
    $region24: #{tpu_custom_call.1} parent=1 // pred_region
      %55 = dma.done [#allocation7], 128
    $region25: #{tpu_custom_call.1} parent=1 // pred_fallthru
      _
    %p56 = scmp.eq.s32.totalorder 0, 0
    // Predicated region
    $region26: #{tpu_custom_call.1} parent=1 // pred_check
      %p57 = pneg %p56
    $region27: #{tpu_custom_call.1} parent=1 // pred_check_branch
      %59 = sbr.rel (%p57) target = $region29
    $region28: #{tpu_custom_call.1} parent=1 // pred_region
      %60 = vst [vmem:[#allocation2] sm:$0xff] 0.0
    $region29: #{tpu_custom_call.1} parent=1 // pred_fallthru
      _
    %v61 = vld [vmem:[#allocation3] sm:$0xff]
    %v62 = vld [vmem:[#allocation6] sm:$0xff]
    %v63 = vld [vmem:[#allocation8] sm:$0xff]
    %v64 = vsub.f32 %v61, %v62
    %v65 = vand.u32 2147483647, %v64
    %v66 = vand.u32 2147483647, %v61
    %v67 = vand.u32 2147483647, %v62
    %v68 = vadd.f32 %v66, %v67
    %vm69 = vcmp.gt.f32.partialorder %v68, 0.0
    %v70 = vrcp.pop %v68
    %v71 = vmul.f32 %v68, %v70
    %v72 = vsub.f32 1.0, %v71
    %v73 = vmul.f32 %v70, %v72
    %v74 = vadd.f32 %v70, %v73
    %vm75 = vweird.f32 %v68
    %vm76 = vweird.f32 %v70
    %vm77 = vmor %vm75, %vm76
    %v78 = vsel %vm77, %v70, %v74
    %v79 = vand.u32 2147483647, %v68
    %vm80 = vcmp.eq.f32.partialorder %v79, 8.507059e+37
    %v81 = vand.u32 %v68, 2147483648
    %v82 = vor.u32 1.1754944e-38, %v81
    %v83 = vsel %vm80, %v82, %v78
    %v84 = vmul.f32 %v65, %v83
    %v85 = vsel %vm69, %v84, 0.0
    %v86 = vmul.f32 %v85, %v63
    %v87 = vld [vmem:[#allocation2] sm:$0xff]
    %v88 = vadd.f32 %v87, %v86
    %89 = vst [vmem:[#allocation2] sm:$0xff] %v88
    // Predicated region
    $region30: #{tpu_custom_call.1} parent=1 // pred_check
      %p90 = pneg %p56
    $region31: #{tpu_custom_call.1} parent=1 // pred_check_branch
      %92 = sbr.rel (%p90) target = $region33
    $region32: #{tpu_custom_call.1} parent=1 // pred_region
      %v93 = vld [vmem:[#allocation2] sm:$0xff]
      %94 = vadd.xlane.f32.xlu0 %v93
      %v95 = vpop.xlane.xlu0 %94
      %v96 = vrot.slane %v95, 4
      %v97 = vadd.f32 %v95, %v96
      %v98 = vrot.slane %v97, 2
      %v99 = vadd.f32 %v97, %v98
      %v100 = vrot.slane %v99, 1
      %v101 = vadd.f32 %v99, %v100
      %s102 = vtos %v101
      %s103 = smul.f32 %s102, 0.1953125
      %s104 = scalar_lea.smem [#allocation9], 0
      %105 = sst [smem:[%s104]] %s103
    $region33: #{tpu_custom_call.1} parent=1 // pred_fallthru
      _
    // Predicated region
    $region34: #{tpu_custom_call.1} parent=1 // pred_check
      _
    $region35: #{tpu_custom_call.1} parent=1 // pred_check_branch
      %107 = sbr.rel (0) target = $region37
    $region36: #{tpu_custom_call.1} parent=1 // pred_region
      %109 = vsyncadd [#allocation5], 0
      %s111 = sshll.u32 %s3, 4
      %s112 = int_to_ptr.hbm [resolvable:$true] %s111
      %114 = dma.smem_to_hbm [#allocation9], 16, %s112, [#allocation5]
    $region37: #{tpu_custom_call.1} parent=1 // pred_fallthru
      _
    // Predicated region
    $region38: #{tpu_custom_call.1} parent=1 // pred_check
      _
    $region39: #{tpu_custom_call.1} parent=1 // pred_check_branch
      %116 = sbr.rel (0) target = $region41
    $region40: #{tpu_custom_call.1} parent=1 // pred_region
      %118 = dma.done [#allocation5], 16
    $region41: #{tpu_custom_call.1} parent=1 // pred_fallthru
      _
    %119 = sfence
    %120 = vsyncpa [#allocation4], 1
    %121 = vsyncpa [#allocation7], 1
    %122 = vsyncpa [#allocation5], 1

</llo_original>
